<compile_context>
chip_gen: v7x
topology: tpu7x:2x2x1
jax: 0.10.0
libtpu: 0.0.40
codegen_flags: <defaults>
</compile_context>

<pallas_src>
import jax
import jax.numpy as jnp
from jax.experimental import pallas as pl
from jax.experimental.pallas import tpu as pltpu


def _round_up(n, m):
    return ((n + m - 1) // m) * m


def _discriminator_kernel(x_ref, y_ref,
                          w1x_ref, w1y_ref, b1_ref,
                          w2_ref, b2_ref,
                          w3_ref, b3_ref,
                          w4_ref, b4_ref,
                          w5_ref, b5_ref,
                          out_ref):
    """One batch tile of the 5-layer MLP: 6 MXU matmuls + VPU bias/ReLU."""
    # Fused concat: concat([x, y], 1) @ W1 == x @ W1[:Fx] + y @ W1[Fx:]
    h = jnp.dot(x_ref[...], w1x_ref[...], preferred_element_type=jnp.float32)
    h = h + jnp.dot(y_ref[...], w1y_ref[...], preferred_element_type=jnp.float32)
    h = jnp.maximum(h + b1_ref[...], 0.0)

    h = jnp.maximum(
        jnp.dot(h, w2_ref[...], preferred_element_type=jnp.float32) + b2_ref[...], 0.0)
    h = jnp.maximum(
        jnp.dot(h, w3_ref[...], preferred_element_type=jnp.float32) + b3_ref[...], 0.0)
    h = jnp.maximum(
        jnp.dot(h, w4_ref[...], preferred_element_type=jnp.float32) + b4_ref[...], 0.0)

    out_ref[...] = (jnp.dot(h, w5_ref[...], preferred_element_type=jnp.float32)
                    + b5_ref[...]).astype(out_ref.dtype)


def pad_params(params, x_feat):
    """Split W1 for the fused concat and zero-pad feature dims to multiples of 128.

    params: list of (W, b) with W stored (in_features, out_features).
    Returns (padded_param_tuple, true_out_features).
    """
    (w1, b1), (w2, b2), (w3, b3), (w4, b4), (w5, b5) = params
    H = w1.shape[1]                 # 2 * hidden_size
    out = w5.shape[1]
    Hp = _round_up(H, 128)
    OUTP = _round_up(out, 128)

    def pad_w(w, rp, cp):
        return jnp.pad(w, ((0, rp - w.shape[0]), (0, cp - w.shape[1])))

    def pad_b(b, cp):
        return jnp.pad(b, (0, cp - b.shape[0])).reshape(1, cp)

    w1x = pad_w(w1[:x_feat], x_feat, Hp)
    w1y = pad_w(w1[x_feat:], w1.shape[0] - x_feat, Hp)
    padded = (w1x, w1y, pad_b(b1, Hp),
              pad_w(w2, Hp, Hp), pad_b(b2, Hp),
              pad_w(w3, Hp, Hp), pad_b(b3, Hp),
              pad_w(w4, Hp, Hp), pad_b(b4, Hp),
              pad_w(w5, Hp, OUTP), pad_b(b5, OUTP))
    return padded, out


def discriminator_forward(x, y, padded_params, out_features, *, block_batch=512):
    """x: (B, Fx), y: (B, Fy). padded_params: output of pad_params."""
    B, Fx = x.shape
    _, Fy = y.shape
    weights = tuple(padded_params)
    w1x, w5 = weights[0], weights[9]
    Hp = w1x.shape[1]
    OUTP = w5.shape[1]

    # Batch tile: multiple of 8, sized well under the 32 MiB scoped-VMEM default
    # (resident weights for small H are a few hundred KiB; per-tile activations
    # at TB=512, Hp=128 are ~256 KiB, double-buffered x/y/out tiles are tiny).
    TB = min(block_batch, _round_up(B, 8))
    Bp = _round_up(B, TB)
    if Bp != B:
        x = jnp.pad(x, ((0, Bp - B), (0, 0)))
        y = jnp.pad(y, ((0, Bp - B), (0, 0)))
    grid = (Bp // TB,)

    # Weights/biases: full-array blocks, same block index every step -> resident.
    weight_specs = [pl.BlockSpec(w.shape, lambda i: (0, 0)) for w in weights]

    flops = 2 * Bp * (Fx * Hp + Fy * Hp + 3 * Hp * Hp + Hp * OUTP)
    bytes_accessed = 4 * (x.size + y.size + Bp * OUTP
                          + sum(int(w.size) for w in weights))

    out_padded = pl.pallas_call(
        _discriminator_kernel,
        out_shape=jax.ShapeDtypeStruct((Bp, OUTP), jnp.float32),
        grid=grid,
        in_specs=[pl.BlockSpec((TB, Fx), lambda i: (i, 0)),
                  pl.BlockSpec((TB, Fy), lambda i: (i, 0))] + weight_specs,
        out_specs=pl.BlockSpec((TB, OUTP), lambda i: (i, 0)),
        compiler_params=pltpu.CompilerParams(
            dimension_semantics=("parallel",)),
        cost_estimate=pl.CostEstimate(flops=flops, transcendentals=0,
                                      bytes_accessed=bytes_accessed),
    )(x, y, *weights)

    # Slice back to the true batch and output width (padding columns contain only
    # the zero-padded bias and are unused; [:, :out_features] is the result).
    return out_padded[:B, :out_features]


def init_params(key, input_size, hidden_size, output_size):
    """PyTorch nn.Linear default init (uniform +/- 1/sqrt(fan_in)).

    Weights stored transposed relative to PyTorch: shape (in, out), so the
    kernel computes h @ W + b == x @ W_pt.T + b."""
    dims = [input_size,
            2 * hidden_size, 2 * hidden_size, 2 * hidden_size, 2 * hidden_size,
            output_size]
    params = []
    for i in range(5):
        fan_in, fan_out = dims[i], dims[i + 1]
        key, kw, kb = jax.random.split(key, 3)
        bound = 1.0 / jnp.sqrt(fan_in)
        w = jax.random.uniform(kw, (fan_in, fan_out), jnp.float32, -bound, bound)
        b = jax.random.uniform(kb, (fan_out,), jnp.float32, -bound, bound)
        params.append((w, b))
    return params


def reference_forward(x, y, params):
    h = jnp.concatenate([x, y], axis=1)
    for i, (w, b) in enumerate(params):
        h = h @ w + b
        if i < len(params) - 1:
            h = jnp.maximum(h, 0.0)
    return h


if __name__ == "__main__":
    # Small shapes consistent with the module: concat(x, y) has input_size cols.
    batch = 8
    x_feat = 4
    y_feat = 4
    input_size = x_feat + y_feat     # 8
    hidden_size = 16                 # 2 * hidden_size = 32
    output_size = 1

    key = jax.random.PRNGKey(0)
    key, kx, ky, kp = jax.random.split(key, 4)
    x = jax.random.normal(kx, (batch, x_feat), jnp.float32)
    y = jax.random.normal(ky, (batch, y_feat), jnp.float32)
    params = init_params(kp, input_size, hidden_size, output_size)

    padded_params, out_features = pad_params(params, x_feat)

    out = discriminator_forward(x, y, padded_params, out_features)
    out = jax.block_until_ready(out)

    ref = reference_forward(x, y, params)
    assert out.shape == (batch, output_size), out.shape
    assert jnp.allclose(out, ref, atol=1e-5, rtol=1e-5), (out, ref)

    print("KERNEL_OK")
</pallas_src>

<mosaic_0001>
module attributes {stable_mosaic.version = 11 : i64} {
  func.func @_discriminator_kernel(%arg0: i32, %arg1: memref<8x4xf32, #tpu.memory_space<vmem>>, %arg2: memref<8x4xf32, #tpu.memory_space<vmem>>, %arg3: memref<4x128xf32, #tpu.memory_space<vmem>>, %arg4: memref<4x128xf32, #tpu.memory_space<vmem>>, %arg5: memref<1x128xf32, #tpu.memory_space<vmem>>, %arg6: memref<128x128xf32, #tpu.memory_space<vmem>>, %arg7: memref<1x128xf32, #tpu.memory_space<vmem>>, %arg8: memref<128x128xf32, #tpu.memory_space<vmem>>, %arg9: memref<1x128xf32, #tpu.memory_space<vmem>>, %arg10: memref<128x128xf32, #tpu.memory_space<vmem>>, %arg11: memref<1x128xf32, #tpu.memory_space<vmem>>, %arg12: memref<128x128xf32, #tpu.memory_space<vmem>>, %arg13: memref<1x128xf32, #tpu.memory_space<vmem>>, %arg14: memref<8x128xf32, #tpu.memory_space<vmem>>) attributes {dimension_semantics = [#tpu.dimension_semantics<parallel>], iteration_bounds = array<i64: 1>, scalar_prefetch = 0 : i64, scratch_operands = 0 : i64, tpu.core_type = #tpu.core_type<tc>, window_params = [{transform_indices = @transform_0, window_bounds = array<i64: 8, 4>}, {transform_indices = @transform_1, window_bounds = array<i64: 8, 4>}, {pipeline_mode = #tpu.pipeline_mode<synchronous>, transform_indices = @transform_2, window_bounds = array<i64: 4, 128>}, {pipeline_mode = #tpu.pipeline_mode<synchronous>, transform_indices = @transform_3, window_bounds = array<i64: 4, 128>}, {pipeline_mode = #tpu.pipeline_mode<synchronous>, transform_indices = @transform_4, window_bounds = array<i64: 1, 128>}, {pipeline_mode = #tpu.pipeline_mode<synchronous>, transform_indices = @transform_5, window_bounds = array<i64: 128, 128>}, {pipeline_mode = #tpu.pipeline_mode<synchronous>, transform_indices = @transform_6, window_bounds = array<i64: 1, 128>}, {pipeline_mode = #tpu.pipeline_mode<synchronous>, transform_indices = @transform_7, window_bounds = array<i64: 128, 128>}, {pipeline_mode = #tpu.pipeline_mode<synchronous>, transform_indices = @transform_8, window_bounds = array<i64: 1, 128>}, {pipeline_mode = #tpu.pipeline_mode<synchronous>, transform_indices = @transform_9, window_bounds = array<i64: 128, 128>}, {pipeline_mode = #tpu.pipeline_mode<synchronous>, transform_indices = @transform_10, window_bounds = array<i64: 1, 128>}, {pipeline_mode = #tpu.pipeline_mode<synchronous>, transform_indices = @transform_11, window_bounds = array<i64: 128, 128>}, {pipeline_mode = #tpu.pipeline_mode<synchronous>, transform_indices = @transform_12, window_bounds = array<i64: 1, 128>}, {transform_indices = @transform_13, window_bounds = array<i64: 8, 128>}]} {
    %c0 = arith.constant 0 : index
    %c0_0 = arith.constant 0 : index
    %0 = vector.load %arg1[%c0, %c0_0] : memref<8x4xf32, #tpu.memory_space<vmem>>, vector<8x4xf32>
    %c0_1 = arith.constant 0 : index
    %c0_2 = arith.constant 0 : index
    %1 = vector.load %arg3[%c0_1, %c0_2] : memref<4x128xf32, #tpu.memory_space<vmem>>, vector<4x128xf32>
    %cst = arith.constant dense<0.000000e+00> : vector<8x128xf32>
    %2 = tpu.matmul %0, %1, %cst {dimension_numbers = #tpu.dot_dimension_numbers<[1], [0], [0], [1], [0, 0, 1, 1], [], []>} : vector<8x4xf32>, vector<4x128xf32>, vector<8x128xf32> -> vector<8x128xf32>
    %c0_3 = arith.constant 0 : index
    %c0_4 = arith.constant 0 : index
    %3 = vector.load %arg2[%c0_3, %c0_4] : memref<8x4xf32, #tpu.memory_space<vmem>>, vector<8x4xf32>
    %c0_5 = arith.constant 0 : index
    %c0_6 = arith.constant 0 : index
    %4 = vector.load %arg4[%c0_5, %c0_6] : memref<4x128xf32, #tpu.memory_space<vmem>>, vector<4x128xf32>
    %cst_7 = arith.constant dense<0.000000e+00> : vector<8x128xf32>
    %5 = tpu.matmul %3, %4, %cst_7 {dimension_numbers = #tpu.dot_dimension_numbers<[1], [0], [0], [1], [0, 0, 1, 1], [], []>} : vector<8x4xf32>, vector<4x128xf32>, vector<8x128xf32> -> vector<8x128xf32>
    %6 = arith.addf %2, %5 : vector<8x128xf32>
    %c0_8 = arith.constant 0 : index
    %c0_9 = arith.constant 0 : index
    %7 = vector.load %arg5[%c0_8, %c0_9] : memref<1x128xf32, #tpu.memory_space<vmem>>, vector<1x128xf32>
    %8 = vector.broadcast %7 : vector<1x128xf32> to vector<8x128xf32>
    %9 = arith.addf %6, %8 : vector<8x128xf32>
    %cst_10 = arith.constant 0.000000e+00 : f32
    %10 = vector.broadcast %cst_10 : f32 to vector<8x128xf32>
    %11 = arith.maximumf %9, %10 : vector<8x128xf32>
    %c0_11 = arith.constant 0 : index
    %c0_12 = arith.constant 0 : index
    %12 = vector.load %arg6[%c0_11, %c0_12] : memref<128x128xf32, #tpu.memory_space<vmem>>, vector<128x128xf32>
    %cst_13 = arith.constant dense<0.000000e+00> : vector<8x128xf32>
    %13 = tpu.matmul %11, %12, %cst_13 {dimension_numbers = #tpu.dot_dimension_numbers<[1], [0], [0], [1], [0, 0, 1, 1], [], []>} : vector<8x128xf32>, vector<128x128xf32>, vector<8x128xf32> -> vector<8x128xf32>
    %c0_14 = arith.constant 0 : index
    %c0_15 = arith.constant 0 : index
    %14 = vector.load %arg7[%c0_14, %c0_15] : memref<1x128xf32, #tpu.memory_space<vmem>>, vector<1x128xf32>
    %15 = vector.broadcast %14 : vector<1x128xf32> to vector<8x128xf32>
    %16 = arith.addf %13, %15 : vector<8x128xf32>
    %cst_16 = arith.constant 0.000000e+00 : f32
    %17 = vector.broadcast %cst_16 : f32 to vector<8x128xf32>
    %18 = arith.maximumf %16, %17 : vector<8x128xf32>
    %c0_17 = arith.constant 0 : index
    %c0_18 = arith.constant 0 : index
    %19 = vector.load %arg8[%c0_17, %c0_18] : memref<128x128xf32, #tpu.memory_space<vmem>>, vector<128x128xf32>
    %cst_19 = arith.constant dense<0.000000e+00> : vector<8x128xf32>
    %20 = tpu.matmul %18, %19, %cst_19 {dimension_numbers = #tpu.dot_dimension_numbers<[1], [0], [0], [1], [0, 0, 1, 1], [], []>} : vector<8x128xf32>, vector<128x128xf32>, vector<8x128xf32> -> vector<8x128xf32>
    %c0_20 = arith.constant 0 : index
    %c0_21 = arith.constant 0 : index
    %21 = vector.load %arg9[%c0_20, %c0_21] : memref<1x128xf32, #tpu.memory_space<vmem>>, vector<1x128xf32>
    %22 = vector.broadcast %21 : vector<1x128xf32> to vector<8x128xf32>
    %23 = arith.addf %20, %22 : vector<8x128xf32>
    %cst_22 = arith.constant 0.000000e+00 : f32
    %24 = vector.broadcast %cst_22 : f32 to vector<8x128xf32>
    %25 = arith.maximumf %23, %24 : vector<8x128xf32>
    %c0_23 = arith.constant 0 : index
    %c0_24 = arith.constant 0 : index
    %26 = vector.load %arg10[%c0_23, %c0_24] : memref<128x128xf32, #tpu.memory_space<vmem>>, vector<128x128xf32>
    %cst_25 = arith.constant dense<0.000000e+00> : vector<8x128xf32>
    %27 = tpu.matmul %25, %26, %cst_25 {dimension_numbers = #tpu.dot_dimension_numbers<[1], [0], [0], [1], [0, 0, 1, 1], [], []>} : vector<8x128xf32>, vector<128x128xf32>, vector<8x128xf32> -> vector<8x128xf32>
    %c0_26 = arith.constant 0 : index
    %c0_27 = arith.constant 0 : index
    %28 = vector.load %arg11[%c0_26, %c0_27] : memref<1x128xf32, #tpu.memory_space<vmem>>, vector<1x128xf32>
    %29 = vector.broadcast %28 : vector<1x128xf32> to vector<8x128xf32>
    %30 = arith.addf %27, %29 : vector<8x128xf32>
    %cst_28 = arith.constant 0.000000e+00 : f32
    %31 = vector.broadcast %cst_28 : f32 to vector<8x128xf32>
    %32 = arith.maximumf %30, %31 : vector<8x128xf32>
    %c0_29 = arith.constant 0 : index
    %c0_30 = arith.constant 0 : index
    %33 = vector.load %arg12[%c0_29, %c0_30] : memref<128x128xf32, #tpu.memory_space<vmem>>, vector<128x128xf32>
    %cst_31 = arith.constant dense<0.000000e+00> : vector<8x128xf32>
    %34 = tpu.matmul %32, %33, %cst_31 {dimension_numbers = #tpu.dot_dimension_numbers<[1], [0], [0], [1], [0, 0, 1, 1], [], []>} : vector<8x128xf32>, vector<128x128xf32>, vector<8x128xf32> -> vector<8x128xf32>
    %c0_32 = arith.constant 0 : index
    %c0_33 = arith.constant 0 : index
    %35 = vector.load %arg13[%c0_32, %c0_33] : memref<1x128xf32, #tpu.memory_space<vmem>>, vector<1x128xf32>
    %36 = vector.broadcast %35 : vector<1x128xf32> to vector<8x128xf32>
    %37 = arith.addf %34, %36 : vector<8x128xf32>
    %c0_34 = arith.constant 0 : index
    %c0_35 = arith.constant 0 : index
    %38 = vector.load %arg14[%c0_34, %c0_35] : memref<8x128xf32, #tpu.memory_space<vmem>>, vector<8x128xf32>
    tpu.vector_store %arg14[%c0_34, %c0_35], %37 {strides = array<i32>} : memref<8x128xf32, #tpu.memory_space<vmem>>, vector<8x128xf32>,
    return
  }
  func.func @transform_0(%arg0: i32) -> (i32, i32) {
    %c0_i32 = arith.constant 0 : i32
    %c0_i32_0 = arith.constant 0 : i32
    return %arg0, %c0_i32 : i32, i32
  }
  func.func @transform_1(%arg0: i32) -> (i32, i32) {
    %c0_i32 = arith.constant 0 : i32
    %c0_i32_0 = arith.constant 0 : i32
    return %arg0, %c0_i32 : i32, i32
  }
  func.func @transform_2(%arg0: i32) -> (i32, i32) {
    %c0_i32 = arith.constant 0 : i32
    %c0_i32_0 = arith.constant 0 : i32
    %c0_i32_1 = arith.constant 0 : i32
    return %c0_i32, %c0_i32_0 : i32, i32
  }
  func.func @transform_3(%arg0: i32) -> (i32, i32) {
    %c0_i32 = arith.constant 0 : i32
    %c0_i32_0 = arith.constant 0 : i32
    %c0_i32_1 = arith.constant 0 : i32
    return %c0_i32, %c0_i32_0 : i32, i32
  }
  func.func @transform_4(%arg0: i32) -> (i32, i32) {
    %c0_i32 = arith.constant 0 : i32
    %c0_i32_0 = arith.constant 0 : i32
    %c0_i32_1 = arith.constant 0 : i32
    return %c0_i32, %c0_i32_0 : i32, i32
  }
  func.func @transform_5(%arg0: i32) -> (i32, i32) {
    %c0_i32 = arith.constant 0 : i32
    %c0_i32_0 = arith.constant 0 : i32
    %c0_i32_1 = arith.constant 0 : i32
    return %c0_i32, %c0_i32_0 : i32, i32
  }
  func.func @transform_6(%arg0: i32) -> (i32, i32) {
    %c0_i32 = arith.constant 0 : i32
    %c0_i32_0 = arith.constant 0 : i32
    %c0_i32_1 = arith.constant 0 : i32
    return %c0_i32, %c0_i32_0 : i32, i32
  }
  func.func @transform_7(%arg0: i32) -> (i32, i32) {
    %c0_i32 = arith.constant 0 : i32
    %c0_i32_0 = arith.constant 0 : i32
    %c0_i32_1 = arith.constant 0 : i32
    return %c0_i32, %c0_i32_0 : i32, i32
  }
  func.func @transform_8(%arg0: i32) -> (i32, i32) {
    %c0_i32 = arith.constant 0 : i32
    %c0_i32_0 = arith.constant 0 : i32
    %c0_i32_1 = arith.constant 0 : i32
    return %c0_i32, %c0_i32_0 : i32, i32
  }
  func.func @transform_9(%arg0: i32) -> (i32, i32) {
    %c0_i32 = arith.constant 0 : i32
    %c0_i32_0 = arith.constant 0 : i32
    %c0_i32_1 = arith.constant 0 : i32
    return %c0_i32, %c0_i32_0 : i32, i32
  }
  func.func @transform_10(%arg0: i32) -> (i32, i32) {
    %c0_i32 = arith.constant 0 : i32
    %c0_i32_0 = arith.constant 0 : i32
    %c0_i32_1 = arith.constant 0 : i32
    return %c0_i32, %c0_i32_0 : i32, i32
  }
  func.func @transform_11(%arg0: i32) -> (i32, i32) {
    %c0_i32 = arith.constant 0 : i32
    %c0_i32_0 = arith.constant 0 : i32
    %c0_i32_1 = arith.constant 0 : i32
    return %c0_i32, %c0_i32_0 : i32, i32
  }
  func.func @transform_12(%arg0: i32) -> (i32, i32) {
    %c0_i32 = arith.constant 0 : i32
    %c0_i32_0 = arith.constant 0 : i32
    %c0_i32_1 = arith.constant 0 : i32
    return %c0_i32, %c0_i32_0 : i32, i32
  }
  func.func @transform_13(%arg0: i32) -> (i32, i32) {
    %c0_i32 = arith.constant 0 : i32
    %c0_i32_0 = arith.constant 0 : i32
    return %arg0, %c0_i32 : i32, i32
  }
}

</mosaic_0001>

<llo_original>
// kernel: tpu_custom_call.1
$region0: #{tpu_custom_call.1}
  #allocation0 [shape = 'u32[]', space=smem, size = 0x4, offset = 0x4, fixed_abs, tag = 'smem constant byte address 0x4 - core index']
  #allocation1 [shape = 'u32[144,128]{1,0:T(1,128)}', space=vmem, size = 0x12000, scoped, tag = 'internal scratch']
  %s0 = inlined_call_operand.vmem [shape: f32[8,4], index: 0, kind: input, shape index: {}]
  %s1 = inlined_call_operand.vmem [shape: f32[8,4], index: 1, kind: input, shape index: {}]
  %s2 = inlined_call_operand.vmem [shape: f32[4,128], index: 2, kind: input, shape index: {}]
  %s3 = inlined_call_operand.vmem [shape: f32[4,128], index: 3, kind: input, shape index: {}]
  %s4 = inlined_call_operand.vmem [shape: f32[1,128], index: 4, kind: input, shape index: {}]
  %s5 = inlined_call_operand.hbm [shape: f32[128,128], index: 5, kind: input, shape index: {}]
  %s6 = inlined_call_operand.vmem [shape: f32[1,128], index: 6, kind: input, shape index: {}]
  %s7 = inlined_call_operand.hbm [shape: f32[128,128], index: 7, kind: input, shape index: {}]
  %s8 = inlined_call_operand.vmem [shape: f32[1,128], index: 8, kind: input, shape index: {}]
  %s9 = inlined_call_operand.hbm [shape: f32[128,128], index: 9, kind: input, shape index: {}]
  %s10 = inlined_call_operand.vmem [shape: f32[1,128], index: 10, kind: input, shape index: {}]
  %s11 = inlined_call_operand.hbm [shape: f32[128,128], index: 11, kind: input, shape index: {}]
  %s12 = inlined_call_operand.vmem [shape: f32[1,128], index: 12, kind: input, shape index: {}]
  %s13 = inlined_call_operand.hbm [shape: f32[8,128], index: 13, kind: output, shape index: {}]
  %s14 = sld [smem:[#allocation0]]
  $region78: #{tpu_custom_call.1} parent=0
    _
  %s16 = ssub.s32 1, %s14
  %s17 = scalar_select 0, %s16, %s14
  $region1: #{tpu_custom_call.1} parent=0
    #allocation2 [shape = 'u8[65536]{0}', space=vmem, size = 0x10000, scoped, tag = 'input window, operand 5, single buffered']
    #allocation3 [shape = 's32[1]{0}', space=sflag, size = 0x4, scoped, tag = 'scoped memory for tpu_custom_call.1']
    #allocation4 [shape = 's32[1]{0}', space=sflag, size = 0x4, scoped, tag = 'scoped memory for tpu_custom_call.1']
    #allocation5 [shape = 'u8[65536]{0}', space=vmem, size = 0x10000, scoped, tag = 'input window, operand 7, single buffered']
    #allocation6 [shape = 's32[1]{0}', space=sflag, size = 0x4, scoped, tag = 'scoped memory for tpu_custom_call.1']
    #allocation7 [shape = 'u8[65536]{0}', space=vmem, size = 0x10000, scoped, tag = 'input window, operand 9, single buffered']
    #allocation8 [shape = 'u8[65536]{0}', space=vmem, size = 0x10000, scoped, tag = 'input window, operand 11, single buffered']
    #allocation9 [shape = 's32[1]{0}', space=sflag, size = 0x4, scoped, tag = 'scoped memory for tpu_custom_call.1']
    #allocation10 [shape = 'u8[4096]{0}', space=vmem, size = 0x1000, scoped, tag = 'output window, operand 0, single buffered']
    %18 = vsyncpa [#allocation3], 0
    %19 = vsyncpa [#allocation6], 0
    %20 = vsyncpa [#allocation9], 0
    %21 = vsyncpa [#allocation4], 0
    // Predicated region
    $region2: #{tpu_custom_call.1} parent=1 // pred_check
      _
    $region3: #{tpu_custom_call.1} parent=1 // pred_check_branch
      %23 = sbr.rel (0) target = $region5
    $region4: #{tpu_custom_call.1} parent=1 // pred_region
      _
    $region5: #{tpu_custom_call.1} parent=1 // pred_fallthru
      _
    // Predicated region
    $region6: #{tpu_custom_call.1} parent=1 // pred_check
      _
    $region7: #{tpu_custom_call.1} parent=1 // pred_check_branch
      %25 = sbr.rel (0) target = $region9
    $region8: #{tpu_custom_call.1} parent=1 // pred_region
      _
    $region9: #{tpu_custom_call.1} parent=1 // pred_fallthru
      _
    // Predicated region
    $region10: #{tpu_custom_call.1} parent=1 // pred_check
      _
    $region11: #{tpu_custom_call.1} parent=1 // pred_check_branch
      %27 = sbr.rel (0) target = $region13
    $region12: #{tpu_custom_call.1} parent=1 // pred_region
      _
    $region13: #{tpu_custom_call.1} parent=1 // pred_fallthru
      _
    // Predicated region
    $region14: #{tpu_custom_call.1} parent=1 // pred_check
      _
    $region15: #{tpu_custom_call.1} parent=1 // pred_check_branch
      %29 = sbr.rel (0) target = $region17
    $region16: #{tpu_custom_call.1} parent=1 // pred_region
      _
    $region17: #{tpu_custom_call.1} parent=1 // pred_fallthru
      _
    // Predicated region
    $region18: #{tpu_custom_call.1} parent=1 // pred_check
      _
    $region19: #{tpu_custom_call.1} parent=1 // pred_check_branch
      %31 = sbr.rel (0) target = $region21
    $region20: #{tpu_custom_call.1} parent=1 // pred_region
      _
    $region21: #{tpu_custom_call.1} parent=1 // pred_fallthru
      _
    // Predicated region
    $region22: #{tpu_custom_call.1} parent=1 // pred_check
      _
    $region23: #{tpu_custom_call.1} parent=1 // pred_check_branch
      %33 = sbr.rel (0) target = $region25
    $region24: #{tpu_custom_call.1} parent=1 // pred_region
      %s35 = ssub.s32 2048, 2048
      %36 = vsyncadd [#allocation3], %s35
      %s37 = sshll.u32 [#allocation2], 4
      %s38 = int_to_ptr.vmem [resolvable:$true] %s37
      %43 = dma.hbm_to_vmem [thread:$0]  %s5, 2048, %s38, [#allocation3], 128, 128, 8
    $region25: #{tpu_custom_call.1} parent=1 // pred_fallthru
      _
    // Predicated region
    $region26: #{tpu_custom_call.1} parent=1 // pred_check
      _
    $region27: #{tpu_custom_call.1} parent=1 // pred_check_branch
      %45 = sbr.rel (0) target = $region29
    $region28: #{tpu_custom_call.1} parent=1 // pred_region
      _
    $region29: #{tpu_custom_call.1} parent=1 // pred_fallthru
      _
    // Predicated region
    $region30: #{tpu_custom_call.1} parent=1 // pred_check
      _
    $region31: #{tpu_custom_call.1} parent=1 // pred_check_branch
      %47 = sbr.rel (0) target = $region33
    $region32: #{tpu_custom_call.1} parent=1 // pred_region
      %s49 = ssub.s32 2048, 2048
      %50 = vsyncadd [#allocation6], %s49
      %s51 = sshll.u32 [#allocation5], 4
      %s52 = int_to_ptr.vmem [resolvable:$true] %s51
      %57 = dma.hbm_to_vmem [thread:$0]  %s7, 2048, %s52, [#allocation6], 128, 128, 8
    $region33: #{tpu_custom_call.1} parent=1 // pred_fallthru
      _
    // Predicated region
    $region34: #{tpu_custom_call.1} parent=1 // pred_check
      _
    $region35: #{tpu_custom_call.1} parent=1 // pred_check_branch
      %59 = sbr.rel (0) target = $region37
    $region36: #{tpu_custom_call.1} parent=1 // pred_region
      _
    $region37: #{tpu_custom_call.1} parent=1 // pred_fallthru
      _
    // Predicated region
    $region38: #{tpu_custom_call.1} parent=1 // pred_check
      _
    $region39: #{tpu_custom_call.1} parent=1 // pred_check_branch
      %61 = sbr.rel (0) target = $region41
    $region40: #{tpu_custom_call.1} parent=1 // pred_region
      %s63 = ssub.s32 2048, 2048
      %64 = vsyncadd [#allocation6], %s63
      %s65 = sshll.u32 [#allocation7], 4
      %s66 = int_to_ptr.vmem [resolvable:$true] %s65
      %71 = dma.hbm_to_vmem [thread:$0]  %s9, 2048, %s66, [#allocation6], 128, 128, 8
    $region41: #{tpu_custom_call.1} parent=1 // pred_fallthru
      _
    // Predicated region
    $region42: #{tpu_custom_call.1} parent=1 // pred_check
      _
    $region43: #{tpu_custom_call.1} parent=1 // pred_check_branch
      %73 = sbr.rel (0) target = $region45
    $region44: #{tpu_custom_call.1} parent=1 // pred_region
      _
    $region45: #{tpu_custom_call.1} parent=1 // pred_fallthru
      _
    // Predicated region
    $region46: #{tpu_custom_call.1} parent=1 // pred_check
      _
    $region47: #{tpu_custom_call.1} parent=1 // pred_check_branch
      %75 = sbr.rel (0) target = $region49
    $region48: #{tpu_custom_call.1} parent=1 // pred_region
      %s77 = ssub.s32 2048, 2048
      %78 = vsyncadd [#allocation9], %s77
      %s79 = sshll.u32 [#allocation8], 4
      %s80 = int_to_ptr.vmem [resolvable:$true] %s79
      %85 = dma.hbm_to_vmem [thread:$0]  %s11, 2048, %s80, [#allocation9], 128, 128, 8
    $region49: #{tpu_custom_call.1} parent=1 // pred_fallthru
      _
    // Predicated region
    $region50: #{tpu_custom_call.1} parent=1 // pred_check
      _
    $region51: #{tpu_custom_call.1} parent=1 // pred_check_branch
      %87 = sbr.rel (0) target = $region53
    $region52: #{tpu_custom_call.1} parent=1 // pred_region
      _
    $region53: #{tpu_custom_call.1} parent=1 // pred_fallthru
      _
    // Predicated region
    $region54: #{tpu_custom_call.1} parent=1 // pred_check
      _
    $region55: #{tpu_custom_call.1} parent=1 // pred_check_branch
      %89 = sbr.rel (0) target = $region57
    $region56: #{tpu_custom_call.1} parent=1 // pred_region
      %90 = dma.done [#allocation3], 2048
    $region57: #{tpu_custom_call.1} parent=1 // pred_fallthru
      _
    // Predicated region
    $region58: #{tpu_custom_call.1} parent=1 // pred_check
      _
    $region59: #{tpu_custom_call.1} parent=1 // pred_check_branch
      %92 = sbr.rel (0) target = $region61
    $region60: #{tpu_custom_call.1} parent=1 // pred_region
      %93 = dma.done [#allocation6], 2048
    $region61: #{tpu_custom_call.1} parent=1 // pred_fallthru
      _
    // Predicated region
    $region62: #{tpu_custom_call.1} parent=1 // pred_check
      _
    $region63: #{tpu_custom_call.1} parent=1 // pred_check_branch
      %95 = sbr.rel (0) target = $region65
    $region64: #{tpu_custom_call.1} parent=1 // pred_region
      %96 = dma.done [#allocation6], 2048
    $region65: #{tpu_custom_call.1} parent=1 // pred_fallthru
      _
    // Predicated region
    $region66: #{tpu_custom_call.1} parent=1 // pred_check
      _
    $region67: #{tpu_custom_call.1} parent=1 // pred_check_branch
      %98 = sbr.rel (0) target = $region69
    $region68: #{tpu_custom_call.1} parent=1 // pred_region
      %99 = dma.done [#allocation9], 2048
    $region69: #{tpu_custom_call.1} parent=1 // pred_fallthru
      _
    %v100 = vld [vmem:[%s0] sm:$0xff]
    %v101 = vld [vmem:[%s2] sm:$0xf]
    %v102 = vld [vmem:[%s1] sm:$0xff]
    %v103 = vld [vmem:[%s3] sm:$0xf]
    %vm104 = vcmask 31744
    %v106 = vsel %vm104, %v102, 0
    %vm108 = vcmask 1043456
    %v110 = vsel %vm108, %v103, 0
    %112 = vmatprep.subr.mxu0 0.0
    %113 = vmatpush1.msra.mxu0 %v110
    %114 = vmatprep.subr.mxu0 0.0
    %115 = vmatpush1.msra.mxu0 0.0
    %116 = vmatprep.subr.mxu0 0.0
    %117 = vmatpush1.msra.mxu0 0.0
    %118 = vmatprep.subr.mxu0 0.0
    %119 = vmatpush1.msra.mxu0 0.0
    %120 = vmatprep.subr.mxu0 0.0
    %121 = vmatpush1.msra.mxu0 0.0
    %122 = vmatprep.subr.mxu0 0.0
    %123 = vmatpush1.msra.mxu0 0.0
    %124 = vmatprep.subr.mxu0 0.0
    %125 = vmatpush1.msra.mxu0 0.0
    %126 = vmatprep.subr.mxu0 0.0
    %127 = vmatpush1.msra.mxu0 0.0
    %128 = vmatprep.subr.mxu0 0.0
    %129 = vmatpush1.msra.mxu0 0.0
    %130 = vmatprep.subr.mxu0 0.0
    %131 = vmatpush1.msra.mxu0 0.0
    %132 = vmatprep.subr.mxu0 0.0
    %133 = vmatpush1.msra.mxu0 0.0
    %134 = vmatprep.subr.mxu0 0.0
    %135 = vmatpush1.msra.mxu0 0.0
    %136 = vmatprep.subr.mxu0 0.0
    %137 = vmatpush1.msra.mxu0 0.0
    %138 = vmatprep.subr.mxu0 0.0
    %139 = vmatpush1.msra.mxu0 0.0
    %140 = vmatprep.subr.mxu0 0.0
    %141 = vmatpush1.msra.mxu0 0.0
    %142 = vmatprep.subr.mxu0 0.0
    %143 = vmatpush1.msra.mxu0 0.0
    %144 = vmatprep.subr.mxu0 0.0
    %145 = vmatpush1.msra.mxu0 0.0
    %146 = vmatprep.subr.mxu0 0.0
    %147 = vmatpush1.msra.mxu0 0.0
    %148 = vmatprep.subr.mxu0 0.0
    %149 = vmatpush1.msra.mxu0 0.0
    %150 = vmatprep.subr.mxu0 0.0
    %151 = vmatpush1.msra.mxu0 0.0
    %152 = vmatprep.subr.mxu0 0.0
    %153 = vmatpush1.msra.mxu0 0.0
    %154 = vmatprep.subr.mxu0 0.0
    %155 = vmatpush1.msra.mxu0 0.0
    %156 = vmatprep.subr.mxu0 0.0
    %157 = vmatpush1.msra.mxu0 0.0
    %158 = vmatprep.subr.mxu0 0.0
    %159 = vmatpush1.msra.mxu0 0.0
    %160 = vmatprep.subr.mxu0 0.0
    %161 = vmatpush1.msra.mxu0 0.0
    %162 = vmatprep.subr.mxu0 0.0
    %163 = vmatpush1.msra.mxu0 0.0
    %164 = vmatprep.subr.mxu0 0.0
    %165 = vmatpush1.msra.mxu0 0.0
    %166 = vmatprep.subr.mxu0 0.0
    %167 = vmatpush1.msra.mxu0 0.0
    %168 = vmatprep.subr.mxu0 0.0
    %169 = vmatpush1.msra.mxu0 0.0
    %170 = vmatprep.subr.mxu0 0.0
    %171 = vmatpush1.msra.mxu0 0.0
    %172 = vmatprep.subr.mxu0 0.0
    %173 = vmatpush1.msra.mxu0 0.0
    %174 = vmatprep.subr.mxu0 0.0
    %175 = vmatpush1.msra.mxu0 0.0
    %176 = vmatprep.mubr.f32.mxu0 0.0
    %177 = vmatmul.mubr.f32.gmra.mrb[0].mxu0 %v106
    %v178 = vpop.f32.mrb[0].mxu0
    %v179 = vadd.f32 0.0, %v178
    %v180 = vpop.f32.mrb[0].mxu0
    %181 = vdwg.mxu0
    %v183 = vsel %vm104, %v100, 0
    %v186 = vsel %vm108, %v101, 0
    %188 = vmatprep.subr.mxu0 0.0
    %189 = vmatpush1.msra.mxu0 %v186
    %190 = vmatprep.subr.mxu0 0.0
    %191 = vmatpush1.msra.mxu0 0.0
    %192 = vmatprep.subr.mxu0 0.0
    %193 = vmatpush1.msra.mxu0 0.0
    %194 = vmatprep.subr.mxu0 0.0
    %195 = vmatpush1.msra.mxu0 0.0
    %196 = vmatprep.subr.mxu0 0.0
    %197 = vmatpush1.msra.mxu0 0.0
    %198 = vmatprep.subr.mxu0 0.0
    %199 = vmatpush1.msra.mxu0 0.0
    %200 = vmatprep.subr.mxu0 0.0
    %201 = vmatpush1.msra.mxu0 0.0
    %202 = vmatprep.subr.mxu0 0.0
    %203 = vmatpush1.msra.mxu0 0.0
    %204 = vmatprep.subr.mxu0 0.0
    %205 = vmatpush1.msra.mxu0 0.0
    %206 = vmatprep.subr.mxu0 0.0
    %207 = vmatpush1.msra.mxu0 0.0
    %208 = vmatprep.subr.mxu0 0.0
    %209 = vmatpush1.msra.mxu0 0.0
    %210 = vmatprep.subr.mxu0 0.0
    %211 = vmatpush1.msra.mxu0 0.0
    %212 = vmatprep.subr.mxu0 0.0
    %213 = vmatpush1.msra.mxu0 0.0
    %214 = vmatprep.subr.mxu0 0.0
    %215 = vmatpush1.msra.mxu0 0.0
    %216 = vmatprep.subr.mxu0 0.0
    %217 = vmatpush1.msra.mxu0 0.0
    %218 = vmatprep.subr.mxu0 0.0
    %219 = vmatpush1.msra.mxu0 0.0
    %220 = vmatprep.subr.mxu0 0.0
    %221 = vmatpush1.msra.mxu0 0.0
    %222 = vmatprep.subr.mxu0 0.0
    %223 = vmatpush1.msra.mxu0 0.0
    %224 = vmatprep.subr.mxu0 0.0
    %225 = vmatpush1.msra.mxu0 0.0
    %226 = vmatprep.subr.mxu0 0.0
    %227 = vmatpush1.msra.mxu0 0.0
    %228 = vmatprep.subr.mxu0 0.0
    %229 = vmatpush1.msra.mxu0 0.0
    %230 = vmatprep.subr.mxu0 0.0
    %231 = vmatpush1.msra.mxu0 0.0
    %232 = vmatprep.subr.mxu0 0.0
    %233 = vmatpush1.msra.mxu0 0.0
    %234 = vmatprep.subr.mxu0 0.0
    %235 = vmatpush1.msra.mxu0 0.0
    %236 = vmatprep.subr.mxu0 0.0
    %237 = vmatpush1.msra.mxu0 0.0
    %238 = vmatprep.subr.mxu0 0.0
    %239 = vmatpush1.msra.mxu0 0.0
    %240 = vmatprep.subr.mxu0 0.0
    %241 = vmatpush1.msra.mxu0 0.0
    %242 = vmatprep.subr.mxu0 0.0
    %243 = vmatpush1.msra.mxu0 0.0
    %244 = vmatprep.subr.mxu0 0.0
    %245 = vmatpush1.msra.mxu0 0.0
    %246 = vmatprep.subr.mxu0 0.0
    %247 = vmatpush1.msra.mxu0 0.0
    %248 = vmatprep.subr.mxu0 0.0
    %249 = vmatpush1.msra.mxu0 0.0
    %250 = vmatprep.subr.mxu0 0.0
    %251 = vmatpush1.msra.mxu0 0.0
    %252 = vmatprep.mubr.f32.mxu0 0.0
    %253 = vmatmul.mubr.f32.gmra.mrb[0].mxu0 %v183
    %v254 = vpop.f32.mrb[0].mxu0
    %v255 = vadd.f32 %v179, %v254
    %v256 = vpop.f32.mrb[0].mxu0
    %257 = vdwg.mxu0
    %v258 = vld [vmem:[%s4] sm:$0x1]
    %v260 = vlaneseq
    %v261 = vshrl.u32 %v260, 7
    %v262 = vsub.s32 0, %v261
    %v263 = vrot.slane %v258, %v262
    %v265 = vadd.f32 %v255, %v263
    %v266 = vmax.f32 %v265, 0.0
    %v267 = vld [vmem:[#allocation2] sm:$0xff]
    %v268 = vld [vmem:[#allocation2 + $0x8] sm:$0xff]
    %v269 = vld [vmem:[#allocation2 + $0x10] sm:$0xff]
    %v270 = vld [vmem:[#allocation2 + $0x18] sm:$0xff]
    %v271 = vld [vmem:[#allocation2 + $0x20] sm:$0xff]
    %v272 = vld [vmem:[#allocation2 + $0x28] sm:$0xff]
    %v273 = vld [vmem:[#allocation2 + $0x30] sm:$0xff]
    %v274 = vld [vmem:[#allocation2 + $0x38] sm:$0xff]
    %v275 = vld [vmem:[#allocation2 + $0x40] sm:$0xff]
    %v276 = vld [vmem:[#allocation2 + $0x48] sm:$0xff]
    %v277 = vld [vmem:[#allocation2 + $0x50] sm:$0xff]
    %v278 = vld [vmem:[#allocation2 + $0x58] sm:$0xff]
    %v279 = vld [vmem:[#allocation2 + $0x60] sm:$0xff]
    %v280 = vld [vmem:[#allocation2 + $0x68] sm:$0xff]
    %v281 = vld [vmem:[#allocation2 + $0x70] sm:$0xff]
    %v282 = vld [vmem:[#allocation2 + $0x78] sm:$0xff]
    %v283 = vld [vmem:[%s6] sm:$0x1]
    %v285 = vlaneseq
    %v286 = vshrl.u32 %v285, 7
    %v287 = vsub.s32 0, %v286
    %v288 = vrot.slane %v283, %v287
    %290 = vmatprep.subr.mxu0 0.0
    %291 = vmatpush1.msra.mxu0 %v267
    %292 = vmatprep.subr.mxu0 0.0
    %293 = vmatpush1.msra.mxu0 %v268
    %294 = vmatprep.subr.mxu0 0.0
    %295 = vmatpush1.msra.mxu0 %v269
    %296 = vmatprep.subr.mxu0 0.0
    %297 = vmatpush1.msra.mxu0 %v270
    %298 = vmatprep.subr.mxu0 0.0
    %299 = vmatpush1.msra.mxu0 %v271
    %300 = vmatprep.subr.mxu0 0.0
    %301 = vmatpush1.msra.mxu0 %v272
    %302 = vmatprep.subr.mxu0 0.0
    %303 = vmatpush1.msra.mxu0 %v273
    %304 = vmatprep.subr.mxu0 0.0
    %305 = vmatpush1.msra.mxu0 %v274
    %306 = vmatprep.subr.mxu0 0.0
    %307 = vmatpush1.msra.mxu0 %v275
    %308 = vmatprep.subr.mxu0 0.0
    %309 = vmatpush1.msra.mxu0 %v276
    %310 = vmatprep.subr.mxu0 0.0
    %311 = vmatpush1.msra.mxu0 %v277
    %312 = vmatprep.subr.mxu0 0.0
    %313 = vmatpush1.msra.mxu0 %v278
    %314 = vmatprep.subr.mxu0 0.0
    %315 = vmatpush1.msra.mxu0 %v279
    %316 = vmatprep.subr.mxu0 0.0
    %317 = vmatpush1.msra.mxu0 %v280
    %318 = vmatprep.subr.mxu0 0.0
    %319 = vmatpush1.msra.mxu0 %v281
    %320 = vmatprep.subr.mxu0 0.0
    %321 = vmatpush1.msra.mxu0 %v282
    %322 = vmatprep.subr.mxu0 0.0
    %323 = vmatpush1.msra.mxu0 0.0
    %324 = vmatprep.subr.mxu0 0.0
    %325 = vmatpush1.msra.mxu0 0.0
    %326 = vmatprep.subr.mxu0 0.0
    %327 = vmatpush1.msra.mxu0 0.0
    %328 = vmatprep.subr.mxu0 0.0
    %329 = vmatpush1.msra.mxu0 0.0
    %330 = vmatprep.subr.mxu0 0.0
    %331 = vmatpush1.msra.mxu0 0.0
    %332 = vmatprep.subr.mxu0 0.0
    %333 = vmatpush1.msra.mxu0 0.0
    %334 = vmatprep.subr.mxu0 0.0
    %335 = vmatpush1.msra.mxu0 0.0
    %336 = vmatprep.subr.mxu0 0.0
    %337 = vmatpush1.msra.mxu0 0.0
    %338 = vmatprep.subr.mxu0 0.0
    %339 = vmatpush1.msra.mxu0 0.0
    %340 = vmatprep.subr.mxu0 0.0
    %341 = vmatpush1.msra.mxu0 0.0
    %342 = vmatprep.subr.mxu0 0.0
    %343 = vmatpush1.msra.mxu0 0.0
    %344 = vmatprep.subr.mxu0 0.0
    %345 = vmatpush1.msra.mxu0 0.0
    %346 = vmatprep.subr.mxu0 0.0
    %347 = vmatpush1.msra.mxu0 0.0
    %348 = vmatprep.subr.mxu0 0.0
    %349 = vmatpush1.msra.mxu0 0.0
    %350 = vmatprep.subr.mxu0 0.0
    %351 = vmatpush1.msra.mxu0 0.0
    %352 = vmatprep.subr.mxu0 0.0
    %353 = vmatpush1.msra.mxu0 0.0
    %354 = vmatprep.mubr.f32.mxu0 0.0
    %355 = vmatmul.mubr.f32.gmra.mrb[0].mxu0 %v266
    %v356 = vpop.f32.mrb[0].mxu0
    %v357 = vadd.f32 %v288, %v356
    %v358 = vpop.f32.mrb[0].mxu0
    %359 = vdwg.mxu0
    %v360 = vmax.f32 %v357, 0.0
    %v361 = vld [vmem:[#allocation5] sm:$0xff]
    %v362 = vld [vmem:[#allocation5 + $0x8] sm:$0xff]
    %v363 = vld [vmem:[#allocation5 + $0x10] sm:$0xff]
    %v364 = vld [vmem:[#allocation5 + $0x18] sm:$0xff]
    %v365 = vld [vmem:[#allocation5 + $0x20] sm:$0xff]
    %v366 = vld [vmem:[#allocation5 + $0x28] sm:$0xff]
    %v367 = vld [vmem:[#allocation5 + $0x30] sm:$0xff]
    %v368 = vld [vmem:[#allocation5 + $0x38] sm:$0xff]
    %v369 = vld [vmem:[#allocation5 + $0x40] sm:$0xff]
    %v370 = vld [vmem:[#allocation5 + $0x48] sm:$0xff]
    %v371 = vld [vmem:[#allocation5 + $0x50] sm:$0xff]
    %v372 = vld [vmem:[#allocation5 + $0x58] sm:$0xff]
    %v373 = vld [vmem:[#allocation5 + $0x60] sm:$0xff]
    %v374 = vld [vmem:[#allocation5 + $0x68] sm:$0xff]
    %v375 = vld [vmem:[#allocation5 + $0x70] sm:$0xff]
    %v376 = vld [vmem:[#allocation5 + $0x78] sm:$0xff]
    %v377 = vld [vmem:[%s8] sm:$0x1]
    %v379 = vlaneseq
    %v380 = vshrl.u32 %v379, 7
    %v381 = vsub.s32 0, %v380
    %v382 = vrot.slane %v377, %v381
    %384 = vmatprep.subr.mxu0 0.0
    %385 = vmatpush1.msra.mxu0 %v361
    %386 = vmatprep.subr.mxu0 0.0
    %387 = vmatpush1.msra.mxu0 %v362
    %388 = vmatprep.subr.mxu0 0.0
    %389 = vmatpush1.msra.mxu0 %v363
    %390 = vmatprep.subr.mxu0 0.0
    %391 = vmatpush1.msra.mxu0 %v364
    %392 = vmatprep.subr.mxu0 0.0
    %393 = vmatpush1.msra.mxu0 %v365
    %394 = vmatprep.subr.mxu0 0.0
    %395 = vmatpush1.msra.mxu0 %v366
    %396 = vmatprep.subr.mxu0 0.0
    %397 = vmatpush1.msra.mxu0 %v367
    %398 = vmatprep.subr.mxu0 0.0
    %399 = vmatpush1.msra.mxu0 %v368
    %400 = vmatprep.subr.mxu0 0.0
    %401 = vmatpush1.msra.mxu0 %v369
    %402 = vmatprep.subr.mxu0 0.0
    %403 = vmatpush1.msra.mxu0 %v370
    %404 = vmatprep.subr.mxu0 0.0
    %405 = vmatpush1.msra.mxu0 %v371
    %406 = vmatprep.subr.mxu0 0.0
    %407 = vmatpush1.msra.mxu0 %v372
    %408 = vmatprep.subr.mxu0 0.0
    %409 = vmatpush1.msra.mxu0 %v373
    %410 = vmatprep.subr.mxu0 0.0
    %411 = vmatpush1.msra.mxu0 %v374
    %412 = vmatprep.subr.mxu0 0.0
    %413 = vmatpush1.msra.mxu0 %v375
    %414 = vmatprep.subr.mxu0 0.0
    %415 = vmatpush1.msra.mxu0 %v376
    %416 = vmatprep.subr.mxu0 0.0
    %417 = vmatpush1.msra.mxu0 0.0
    %418 = vmatprep.subr.mxu0 0.0
    %419 = vmatpush1.msra.mxu0 0.0
    %420 = vmatprep.subr.mxu0 0.0
    %421 = vmatpush1.msra.mxu0 0.0
    %422 = vmatprep.subr.mxu0 0.0
    %423 = vmatpush1.msra.mxu0 0.0
    %424 = vmatprep.subr.mxu0 0.0
    %425 = vmatpush1.msra.mxu0 0.0
    %426 = vmatprep.subr.mxu0 0.0
    %427 = vmatpush1.msra.mxu0 0.0
    %428 = vmatprep.subr.mxu0 0.0
    %429 = vmatpush1.msra.mxu0 0.0
    %430 = vmatprep.subr.mxu0 0.0
    %431 = vmatpush1.msra.mxu0 0.0
    %432 = vmatprep.subr.mxu0 0.0
    %433 = vmatpush1.msra.mxu0 0.0
    %434 = vmatprep.subr.mxu0 0.0
    %435 = vmatpush1.msra.mxu0 0.0
    %436 = vmatprep.subr.mxu0 0.0
    %437 = vmatpush1.msra.mxu0 0.0
    %438 = vmatprep.subr.mxu0 0.0
    %439 = vmatpush1.msra.mxu0 0.0
    %440 = vmatprep.subr.mxu0 0.0
    %441 = vmatpush1.msra.mxu0 0.0
    %442 = vmatprep.subr.mxu0 0.0
    %443 = vmatpush1.msra.mxu0 0.0
    %444 = vmatprep.subr.mxu0 0.0
    %445 = vmatpush1.msra.mxu0 0.0
    %446 = vmatprep.subr.mxu0 0.0
    %447 = vmatpush1.msra.mxu0 0.0
    %448 = vmatprep.mubr.f32.mxu0 0.0
    %449 = vmatmul.mubr.f32.gmra.mrb[0].mxu0 %v360
    %v450 = vpop.f32.mrb[0].mxu0
    %v451 = vadd.f32 %v382, %v450
    %v452 = vpop.f32.mrb[0].mxu0
    %453 = vdwg.mxu0
    %v454 = vmax.f32 %v451, 0.0
    %v455 = vld [vmem:[#allocation7] sm:$0xff]
    %v456 = vld [vmem:[#allocation7 + $0x8] sm:$0xff]
    %v457 = vld [vmem:[#allocation7 + $0x10] sm:$0xff]
    %v458 = vld [vmem:[#allocation7 + $0x18] sm:$0xff]
    %v459 = vld [vmem:[#allocation7 + $0x20] sm:$0xff]
    %v460 = vld [vmem:[#allocation7 + $0x28] sm:$0xff]
    %v461 = vld [vmem:[#allocation7 + $0x30] sm:$0xff]
    %v462 = vld [vmem:[#allocation7 + $0x38] sm:$0xff]
    %v463 = vld [vmem:[#allocation7 + $0x40] sm:$0xff]
    %v464 = vld [vmem:[#allocation7 + $0x48] sm:$0xff]
    %v465 = vld [vmem:[#allocation7 + $0x50] sm:$0xff]
    %v466 = vld [vmem:[#allocation7 + $0x58] sm:$0xff]
    %v467 = vld [vmem:[#allocation7 + $0x60] sm:$0xff]
    %v468 = vld [vmem:[#allocation7 + $0x68] sm:$0xff]
    %v469 = vld [vmem:[#allocation7 + $0x70] sm:$0xff]
    %v470 = vld [vmem:[#allocation7 + $0x78] sm:$0xff]
    %v471 = vld [vmem:[%s10] sm:$0x1]
    %v473 = vlaneseq
    %v474 = vshrl.u32 %v473, 7
    %v475 = vsub.s32 0, %v474
    %v476 = vrot.slane %v471, %v475
    %478 = vmatprep.subr.mxu0 0.0
    %479 = vmatpush1.msra.mxu0 %v455
    %480 = vmatprep.subr.mxu0 0.0
    %481 = vmatpush1.msra.mxu0 %v456
    %482 = vmatprep.subr.mxu0 0.0
    %483 = vmatpush1.msra.mxu0 %v457
    %484 = vmatprep.subr.mxu0 0.0
    %485 = vmatpush1.msra.mxu0 %v458
    %486 = vmatprep.subr.mxu0 0.0
    %487 = vmatpush1.msra.mxu0 %v459
    %488 = vmatprep.subr.mxu0 0.0
    %489 = vmatpush1.msra.mxu0 %v460
    %490 = vmatprep.subr.mxu0 0.0
    %491 = vmatpush1.msra.mxu0 %v461
    %492 = vmatprep.subr.mxu0 0.0
    %493 = vmatpush1.msra.mxu0 %v462
    %494 = vmatprep.subr.mxu0 0.0
    %495 = vmatpush1.msra.mxu0 %v463
    %496 = vmatprep.subr.mxu0 0.0
    %497 = vmatpush1.msra.mxu0 %v464
    %498 = vmatprep.subr.mxu0 0.0
    %499 = vmatpush1.msra.mxu0 %v465
    %500 = vmatprep.subr.mxu0 0.0
    %501 = vmatpush1.msra.mxu0 %v466
    %502 = vmatprep.subr.mxu0 0.0
    %503 = vmatpush1.msra.mxu0 %v467
    %504 = vmatprep.subr.mxu0 0.0
    %505 = vmatpush1.msra.mxu0 %v468
    %506 = vmatprep.subr.mxu0 0.0
    %507 = vmatpush1.msra.mxu0 %v469
    %508 = vmatprep.subr.mxu0 0.0
    %509 = vmatpush1.msra.mxu0 %v470
    %510 = vmatprep.subr.mxu0 0.0
    %511 = vmatpush1.msra.mxu0 0.0
    %512 = vmatprep.subr.mxu0 0.0
    %513 = vmatpush1.msra.mxu0 0.0
    %514 = vmatprep.subr.mxu0 0.0
    %515 = vmatpush1.msra.mxu0 0.0
    %516 = vmatprep.subr.mxu0 0.0
    %517 = vmatpush1.msra.mxu0 0.0
    %518 = vmatprep.subr.mxu0 0.0
    %519 = vmatpush1.msra.mxu0 0.0
    %520 = vmatprep.subr.mxu0 0.0
    %521 = vmatpush1.msra.mxu0 0.0
    %522 = vmatprep.subr.mxu0 0.0
    %523 = vmatpush1.msra.mxu0 0.0
    %524 = vmatprep.subr.mxu0 0.0
    %525 = vmatpush1.msra.mxu0 0.0
    %526 = vmatprep.subr.mxu0 0.0
    %527 = vmatpush1.msra.mxu0 0.0
    %528 = vmatprep.subr.mxu0 0.0
    %529 = vmatpush1.msra.mxu0 0.0
    %530 = vmatprep.subr.mxu0 0.0
    %531 = vmatpush1.msra.mxu0 0.0
    %532 = vmatprep.subr.mxu0 0.0
    %533 = vmatpush1.msra.mxu0 0.0
    %534 = vmatprep.subr.mxu0 0.0
    %535 = vmatpush1.msra.mxu0 0.0
    %536 = vmatprep.subr.mxu0 0.0
    %537 = vmatpush1.msra.mxu0 0.0
    %538 = vmatprep.subr.mxu0 0.0
    %539 = vmatpush1.msra.mxu0 0.0
    %540 = vmatprep.subr.mxu0 0.0
    %541 = vmatpush1.msra.mxu0 0.0
    %542 = vmatprep.mubr.f32.mxu0 0.0
    %543 = vmatmul.mubr.f32.gmra.mrb[0].mxu0 %v454
    %v544 = vpop.f32.mrb[0].mxu0
    %v545 = vadd.f32 %v476, %v544
    %v546 = vpop.f32.mrb[0].mxu0
    %547 = vdwg.mxu0
    %v548 = vmax.f32 %v545, 0.0
    %v549 = vld [vmem:[#allocation8] sm:$0xff]
    %v550 = vld [vmem:[#allocation8 + $0x8] sm:$0xff]
    %v551 = vld [vmem:[#allocation8 + $0x10] sm:$0xff]
    %v552 = vld [vmem:[#allocation8 + $0x18] sm:$0xff]
    %v553 = vld [vmem:[#allocation8 + $0x20] sm:$0xff]
    %v554 = vld [vmem:[#allocation8 + $0x28] sm:$0xff]
    %v555 = vld [vmem:[#allocation8 + $0x30] sm:$0xff]
    %v556 = vld [vmem:[#allocation8 + $0x38] sm:$0xff]
    %v557 = vld [vmem:[#allocation8 + $0x40] sm:$0xff]
    %v558 = vld [vmem:[#allocation8 + $0x48] sm:$0xff]
    %v559 = vld [vmem:[#allocation8 + $0x50] sm:$0xff]
    %v560 = vld [vmem:[#allocation8 + $0x58] sm:$0xff]
    %v561 = vld [vmem:[#allocation8 + $0x60] sm:$0xff]
    %v562 = vld [vmem:[#allocation8 + $0x68] sm:$0xff]
    %v563 = vld [vmem:[#allocation8 + $0x70] sm:$0xff]
    %v564 = vld [vmem:[#allocation8 + $0x78] sm:$0xff]
    %v565 = vld [vmem:[%s12] sm:$0x1]
    %v567 = vlaneseq
    %v568 = vshrl.u32 %v567, 7
    %v569 = vsub.s32 0, %v568
    %v570 = vrot.slane %v565, %v569
    %572 = vmatprep.subr.mxu0 0.0
    %573 = vmatpush1.msra.mxu0 %v549
    %574 = vmatprep.subr.mxu0 0.0
    %575 = vmatpush1.msra.mxu0 %v550
    %576 = vmatprep.subr.mxu0 0.0
    %577 = vmatpush1.msra.mxu0 %v551
    %578 = vmatprep.subr.mxu0 0.0
    %579 = vmatpush1.msra.mxu0 %v552
    %580 = vmatprep.subr.mxu0 0.0
    %581 = vmatpush1.msra.mxu0 %v553
    %582 = vmatprep.subr.mxu0 0.0
    %583 = vmatpush1.msra.mxu0 %v554
    %584 = vmatprep.subr.mxu0 0.0
    %585 = vmatpush1.msra.mxu0 %v555
    %586 = vmatprep.subr.mxu0 0.0
    %587 = vmatpush1.msra.mxu0 %v556
    %588 = vmatprep.subr.mxu0 0.0
    %589 = vmatpush1.msra.mxu0 %v557
    %590 = vmatprep.subr.mxu0 0.0
    %591 = vmatpush1.msra.mxu0 %v558
    %592 = vmatprep.subr.mxu0 0.0
    %593 = vmatpush1.msra.mxu0 %v559
    %594 = vmatprep.subr.mxu0 0.0
    %595 = vmatpush1.msra.mxu0 %v560
    %596 = vmatprep.subr.mxu0 0.0
    %597 = vmatpush1.msra.mxu0 %v561
    %598 = vmatprep.subr.mxu0 0.0
    %599 = vmatpush1.msra.mxu0 %v562
    %600 = vmatprep.subr.mxu0 0.0
    %601 = vmatpush1.msra.mxu0 %v563
    %602 = vmatprep.subr.mxu0 0.0
    %603 = vmatpush1.msra.mxu0 %v564
    %604 = vmatprep.subr.mxu0 0.0
    %605 = vmatpush1.msra.mxu0 0.0
    %606 = vmatprep.subr.mxu0 0.0
    %607 = vmatpush1.msra.mxu0 0.0
    %608 = vmatprep.subr.mxu0 0.0
    %609 = vmatpush1.msra.mxu0 0.0
    %610 = vmatprep.subr.mxu0 0.0
    %611 = vmatpush1.msra.mxu0 0.0
    %612 = vmatprep.subr.mxu0 0.0
    %613 = vmatpush1.msra.mxu0 0.0
    %614 = vmatprep.subr.mxu0 0.0
    %615 = vmatpush1.msra.mxu0 0.0
    %616 = vmatprep.subr.mxu0 0.0
    %617 = vmatpush1.msra.mxu0 0.0
    %618 = vmatprep.subr.mxu0 0.0
    %619 = vmatpush1.msra.mxu0 0.0
    %620 = vmatprep.subr.mxu0 0.0
    %621 = vmatpush1.msra.mxu0 0.0
    %622 = vmatprep.subr.mxu0 0.0
    %623 = vmatpush1.msra.mxu0 0.0
    %624 = vmatprep.subr.mxu0 0.0
    %625 = vmatpush1.msra.mxu0 0.0
    %626 = vmatprep.subr.mxu0 0.0
    %627 = vmatpush1.msra.mxu0 0.0
    %628 = vmatprep.subr.mxu0 0.0
    %629 = vmatpush1.msra.mxu0 0.0
    %630 = vmatprep.subr.mxu0 0.0
    %631 = vmatpush1.msra.mxu0 0.0
    %632 = vmatprep.subr.mxu0 0.0
    %633 = vmatpush1.msra.mxu0 0.0
    %634 = vmatprep.subr.mxu0 0.0
    %635 = vmatpush1.msra.mxu0 0.0
    %636 = vmatprep.mubr.f32.mxu0 0.0
    %637 = vmatmul.mubr.f32.gmra.mrb[0].mxu0 %v548
    %v638 = vpop.f32.mrb[0].mxu0
    %v639 = vadd.f32 %v570, %v638
    %v640 = vpop.f32.mrb[0].mxu0
    %641 = vdwg.mxu0
    %642 = vst [vmem:[#allocation10] sm:$0xff] %v639
    // Predicated region
    $region70: #{tpu_custom_call.1} parent=1 // pred_check
      _
    $region71: #{tpu_custom_call.1} parent=1 // pred_check_branch
      %644 = sbr.rel (0) target = $region73
    $region72: #{tpu_custom_call.1} parent=1 // pred_region
      %s646 = ssub.s32 128, 128
      %647 = vsyncadd [#allocation4], %s646
      %s649 = sshll.u32 [#allocation10], 4
      %s650 = int_to_ptr.vmem [resolvable:$true] %s649
      %652 = dma.vmem_to_hbm [thread:$0]  %s650, 128, %s13, [#allocation4]
    $region73: #{tpu_custom_call.1} parent=1 // pred_fallthru
      _
    // Predicated region
    $region74: #{tpu_custom_call.1} parent=1 // pred_check
      _
    $region75: #{tpu_custom_call.1} parent=1 // pred_check_branch
      %654 = sbr.rel (0) target = $region77
    $region76: #{tpu_custom_call.1} parent=1 // pred_region
      %655 = dma.done [#allocation4], 128
    $region77: #{tpu_custom_call.1} parent=1 // pred_fallthru
      _
    %656 = vsyncpa [#allocation3], 1
    %657 = vsyncpa [#allocation6], 1
    %658 = vsyncpa [#allocation9], 1
    %659 = vsyncpa [#allocation4], 1

</llo_original>
